<compile_context>
chip_gen: v5e
topology: v5e:2x2
jax: 0.10.0
libtpu: 0.0.40
codegen_flags: <defaults>
</compile_context>

<pallas_src>
import jax
import jax.numpy as jnp
from jax.experimental import pallas as pl
from jax.experimental.pallas import tpu as pltpu


# ---------------------------------------------------------------------------
# Kernel: one (batch tile, spatial tile) block per grid step.
#   x_ref : (TILE_N, C_in,  TILE_HW)  input channels x spatial tile
#   w_ref : (C_out, C_in)             1x1 conv weight (grid-invariant)
#   b_ref : (C_out, 1)                bias            (grid-invariant)
#   o_ref : (TILE_N, C_out, TILE_HW)  output (lane-dense last dim)
# ---------------------------------------------------------------------------
def _linear1x1_kernel(x_ref, w_ref, b_ref, o_ref):
    w = w_ref[...]
    bias = b_ref[...]                      # (C_out, 1) broadcasts over lanes
    for i in range(x_ref.shape[0]):        # static, small (<= 8) unroll
        y = jnp.dot(w, x_ref[i], preferred_element_type=jnp.float32)
        o_ref[i] = (y + bias).astype(o_ref.dtype)


def _round_up(a, m):
    return ((a + m - 1) // m) * m


def _vmem_capacity_bytes():
    """Best-effort physical VMEM capacity; falls back to the v7x floor."""
    try:
        info = pltpu.get_tpu_info()
        for attr in ("vmem_capacity_bytes", "vmem_bytes", "vmem_size_bytes"):
            v = getattr(info, attr, None)
            if v:
                return int(v)
    except Exception:
        pass
    return 64 << 20   # v7x per-TC VMEM — the smallest across v5e/v6e/v7x


def linear1x1_forward(x, w, b=None):
    """1x1 Conv2d forward.

    x: (N, C_in, H, W) float32
    w: (C_out, C_in)   float32  (== PyTorch conv weight[:, :, 0, 0])
    b: (C_out,)        float32 or None
    returns (N, C_out, H, W)
    """
    n, c_in, h, w_sp = x.shape
    c_out = w.shape[0]
    assert w.shape == (c_out, c_in), w.shape
    itemsize = 4  # f32 path

    hw = h * w_sp
    hw128 = _round_up(hw, 128)

    # --- VMEM budget (generation aware) ------------------------------------
    vmem_cap = _vmem_capacity_bytes()
    budget_total = min(vmem_cap // 2, 48 << 20)

    w_bytes = c_out * c_in * itemsize
    single_buffer_w = w_bytes > (4 << 20)
    w_bufs = 1 if single_buffer_w else 2
    budget_data = max(budget_total - w_bufs * w_bytes - (1 << 20), 1 << 20)

    # --- lane tile ----------------------------------------------------------
    per_lane = 2 * (c_in + c_out) * itemsize          # double-buffered x + out
    cap_lanes = max(128, min(8192, (budget_data // per_lane) // 128 * 128))
    if hw128 <= cap_lanes:
        tile_hw = hw128                               # whole image in one tile
    else:
        # Prefer the largest tile that divides the 128-aligned extent (no
        # extra padding) ...
        t = cap_lanes
        best_div = 128
        while t >= 128:
            if hw128 % t == 0:
                best_div = t
                break
            t -= 128
        # ... but never degrade to tiny tiles: then pad up to the big tile.
        tile_hw = best_div if best_div >= max(512, cap_lanes // 4) else cap_lanes
    hw_p = _round_up(hw, tile_hw)
    n_hw_tiles = hw_p // tile_hw

    # --- batch (image) tile: amortize per-step overhead when HW is small ----
    tile_n = 1
    if n_hw_tiles == 1 and n > 1:
        per_image = 2 * (c_in + c_out) * itemsize * tile_hw
        cap_n = int(min(max(1, budget_data // per_image), max(1, n // 2), 8))
        for d in range(cap_n, 0, -1):
            if n % d == 0:
                tile_n = d
                break
    grid = (n // tile_n, n_hw_tiles)

    # --- wrapper-side data prep ---------------------------------------------
    x_flat = x.reshape(n, c_in, hw)
    if hw_p != hw:
        # TODO(synk): handle the ragged spatial tail in-kernel (masked tail
        # store) to avoid this extra HBM pad/crop pass for non-aligned H*W.
        x_flat = jnp.pad(x_flat, ((0, 0), (0, 0), (0, hw_p - hw)))

    b_arr = (jnp.zeros((c_out, 1), x.dtype) if b is None
             else b.reshape(c_out, 1).astype(x.dtype))

    # Grid-invariant weight / bias.  Single-buffer the weight only when it is
    # large; for small weights the default double-buffering costs a few KiB.
    if single_buffer_w:
        w_spec = pl.BlockSpec((c_out, c_in), lambda i, j: (0, 0),
                              pipeline_mode=pl.Buffered(1))
    else:
        w_spec = pl.BlockSpec((c_out, c_in), lambda i, j: (0, 0))
    b_spec = pl.BlockSpec((c_out, 1), lambda i, j: (0, 0))

    # Explicit scoped-VMEM limit so bigger tiles don't hit the 16/32 MiB
    # generation defaults.
    x_block_bytes = tile_n * c_in * tile_hw * itemsize
    o_block_bytes = tile_n * c_out * tile_hw * itemsize
    need = (2 * (x_block_bytes + o_block_bytes) + w_bufs * w_bytes
            + 2 * c_out * itemsize + (2 << 20))
    vmem_limit = int(min(vmem_cap * 3 // 4, max(need, 16 << 20)))

    out_flat = pl.pallas_call(
        _linear1x1_kernel,
        out_shape=jax.ShapeDtypeStruct((n, c_out, hw_p), x.dtype),
        grid_spec=pltpu.PrefetchScalarGridSpec(
            num_scalar_prefetch=0,
            grid=grid,
            in_specs=[
                pl.BlockSpec((tile_n, c_in, tile_hw), lambda i, j: (i, 0, j)),
                w_spec,
                b_spec,
            ],
            out_specs=pl.BlockSpec((tile_n, c_out, tile_hw),
                                   lambda i, j: (i, 0, j)),
        ),
        compiler_params=pltpu.CompilerParams(
            dimension_semantics=("parallel", "parallel"),
            vmem_limit_bytes=vmem_limit),
    )(x_flat, w, b_arr)

    if hw_p != hw:
        out_flat = out_flat[:, :, :hw]
    return out_flat.reshape(n, c_out, h, w_sp)


# ---------------------------------------------------------------------------
# Pure-JAX reference (mirrors torch.nn.Conv2d(c_in, c_out, kernel_size=(1,1))).
# ---------------------------------------------------------------------------
def linear1x1_reference(x, w, b=None):
    y = jnp.einsum('nihw,oi->nohw', x, w)
    if b is not None:
        y = y + b[None, :, None, None]
    return y


if __name__ == "__main__":
    def run_case(n, c_in, h, w_sp, c_out, key):
        kx, kw, kb = jax.random.split(key, 3)
        x = jax.random.normal(kx, (n, c_in, h, w_sp), dtype=jnp.float32)
        # Conv2d default init: kaiming_uniform(a=sqrt(5)) -> U(-1/sqrt(fan_in),
        # +1/sqrt(fan_in)) with fan_in = c_in * 1 * 1; bias from the same bound.
        bound = 1.0 / (c_in ** 0.5)
        w = jax.random.uniform(kw, (c_out, c_in), jnp.float32, -bound, bound)
        b = jax.random.uniform(kb, (c_out,), jnp.float32, -bound, bound)

        out = jax.block_until_ready(linear1x1_forward(x, w, b))
        ref = jax.block_until_ready(linear1x1_reference(x, w, b))
        assert out.shape == (n, c_out, h, w_sp), out.shape
        err = float(jnp.max(jnp.abs(out - ref)))
        assert jnp.allclose(out, ref, atol=1e-4, rtol=1e-4), err

    key = jax.random.PRNGKey(0)
    k1, k2 = jax.random.split(key)

    # Case 1: small shapes consistent with the module (H*W = 128, no padding).
    run_case(2, 4, 16, 8, 32, k1)
    # Case 2: ragged spatial (H*W = 153 -> padded to 256) + 2 images per step.
    run_case(4, 4, 17, 9, 32, k2)

    print("KERNEL_OK")
</pallas_src>

<mosaic_0001>
module attributes {stable_mosaic.version = 11 : i64} {
  func.func @_linear1x1_kernel(%arg0: i32, %arg1: i32, %arg2: memref<1x4x128xf32, #tpu.memory_space<vmem>>, %arg3: memref<32x4xf32, #tpu.memory_space<vmem>>, %arg4: memref<32x1xf32, #tpu.memory_space<vmem>>, %arg5: memref<1x32x128xf32, #tpu.memory_space<vmem>>) attributes {dimension_semantics = [#tpu.dimension_semantics<parallel>, #tpu.dimension_semantics<parallel>], iteration_bounds = array<i64: 2, 1>, scalar_prefetch = 0 : i64, scratch_operands = 0 : i64, tpu.core_type = #tpu.core_type<tc>, window_params = [{transform_indices = @transform_0, window_bounds = array<i64: 1, 4, 128>}, {pipeline_mode = #tpu.pipeline_mode<synchronous>, transform_indices = @transform_1, window_bounds = array<i64: 32, 4>}, {pipeline_mode = #tpu.pipeline_mode<synchronous>, transform_indices = @transform_2, window_bounds = array<i64: 32, 1>}, {transform_indices = @transform_3, window_bounds = array<i64: 1, 32, 128>}]} {
    %c0 = arith.constant 0 : index
    %c0_0 = arith.constant 0 : index
    %0 = vector.load %arg3[%c0, %c0_0] : memref<32x4xf32, #tpu.memory_space<vmem>>, vector<32x4xf32>
    %c0_1 = arith.constant 0 : index
    %c0_2 = arith.constant 0 : index
    %1 = vector.load %arg4[%c0_1, %c0_2] : memref<32x1xf32, #tpu.memory_space<vmem>>, vector<32x1xf32>
    %c0_3 = arith.constant 0 : index
    %c0_4 = arith.constant 0 : index
    %c0_5 = arith.constant 0 : index
    %2 = vector.load %arg2[%c0_3, %c0_4, %c0_5] : memref<1x4x128xf32, #tpu.memory_space<vmem>>, vector<1x4x128xf32>
    %3 = vector.shape_cast %2 : vector<1x4x128xf32> to vector<4x128xf32>
    %cst = arith.constant dense<0.000000e+00> : vector<32x128xf32>
    %4 = tpu.matmul %0, %3, %cst {dimension_numbers = #tpu.dot_dimension_numbers<[1], [0], [0], [1], [0, 0, 1, 1], [], []>} : vector<32x4xf32>, vector<4x128xf32>, vector<32x128xf32> -> vector<32x128xf32>
    %5 = vector.broadcast %1 : vector<32x1xf32> to vector<32x128xf32>
    %6 = arith.addf %4, %5 : vector<32x128xf32>
    %c0_6 = arith.constant 0 : index
    %c0_7 = arith.constant 0 : index
    %c0_8 = arith.constant 0 : index
    %7 = vector.load %arg5[%c0_6, %c0_7, %c0_8] : memref<1x32x128xf32, #tpu.memory_space<vmem>>, vector<1x32x128xf32>
    %8 = vector.shape_cast %7 : vector<1x32x128xf32> to vector<32x128xf32>
    %9 = vector.shape_cast %6 : vector<32x128xf32> to vector<1x32x128xf32>
    tpu.vector_store %arg5[%c0_6, %c0_7, %c0_8], %9 {strides = array<i32>} : memref<1x32x128xf32, #tpu.memory_space<vmem>>, vector<1x32x128xf32>,
    return
  }
  func.func @transform_0(%arg0: i32, %arg1: i32) -> (i32, i32, i32) {
    %c0_i32 = arith.constant 0 : i32
    %c0_i32_0 = arith.constant 0 : i32
    return %arg0, %c0_i32, %arg1 : i32, i32, i32
  }
  func.func @transform_1(%arg0: i32, %arg1: i32) -> (i32, i32) {
    %c0_i32 = arith.constant 0 : i32
    %c0_i32_0 = arith.constant 0 : i32
    %c0_i32_1 = arith.constant 0 : i32
    return %c0_i32, %c0_i32_0 : i32, i32
  }
  func.func @transform_2(%arg0: i32, %arg1: i32) -> (i32, i32) {
    %c0_i32 = arith.constant 0 : i32
    %c0_i32_0 = arith.constant 0 : i32
    %c0_i32_1 = arith.constant 0 : i32
    return %c0_i32, %c0_i32_0 : i32, i32
  }
  func.func @transform_3(%arg0: i32, %arg1: i32) -> (i32, i32, i32) {
    %c0_i32 = arith.constant 0 : i32
    %c0_i32_0 = arith.constant 0 : i32
    return %arg0, %c0_i32, %arg1 : i32, i32, i32
  }
}

</mosaic_0001>

<llo_original>
// kernel: tpu_custom_call.1
$region0: #{tpu_custom_call.1}
  #allocation0 [shape = 'u32[]', space=smem, size = 0x4, offset = 0x4, fixed_abs, tag = 'smem constant byte address 0x4 - core index']
  #allocation1 [shape = 'u32[72,128]{1,0:T(1,128)}', space=vmem, size = 0x9000, scoped, tag = 'internal scratch']
  %s0 = inlined_call_operand.vmem [shape: f32[2,4,128], index: 0, kind: input, shape index: {}]
  %s1 = inlined_call_operand.vmem [shape: f32[32,4], index: 1, kind: input, shape index: {}]
  %s2 = inlined_call_operand.vmem [shape: f32[32,1], index: 2, kind: input, shape index: {}]
  %s3 = inlined_call_operand.hbm [shape: f32[2,32,128], index: 3, kind: output, shape index: {}]
  %s4 = sld [smem:[#allocation0]]
  $region45: #{tpu_custom_call.1} parent=0
    _
  %s6 = ssub.s32 1, %s4
  %s7 = scalar_select 0, %s6, %s4
  $region1: #{tpu_custom_call.1} parent=0
    #allocation2 [shape = 'u8[32768]{0}', space=vmem, size = 0x8000, scoped, tag = 'output window, operand 0']
    #allocation3 [shape = 's32[2]{0}', space=sflag, size = 0x8, scoped, tag = 'scoped memory for tpu_custom_call.1']
    %8 = vsyncpa [#allocation3], 0
    %s9 = scalar_lea.sflag [#allocation3], 1
    %10 = vsyncpa %s9, 0
    loop: start=0, step=1, limit=4
    $region2: #{tpu_custom_call.1} parent=1 // loop_pre_header
      _
    $region3: #{tpu_custom_call.1} parent=1 // loop_header
      %s12 = sphi 0, %s16
      %p13 = scmp.ge.s32.totalorder %s12, 4
      %s19 = sphi 0, %s31
      %s20 = sphi 0, %s27
      %s21 = sphi 0, %s19
      %s22 = sphi 0, %s20
      %s23 = sphi 0, %s21
      %s24 = sphi 0, %s22
      %s36 = sphi 0, %s38
      %s39 = sphi 0, %s36
      %s40 = sphi 0, %s39
      %s56 = sphi 0, %s40
      %s60 = sphi 0, %s60
      %s62 = sphi 0, %s60
      %s63 = sphi 0, %s62
      %s77 = sphi 0, %s63
      %s81 = sphi 0, %s81
      %s83 = sphi 0, %s81
      %s84 = sphi 0, %s83
      %s98 = sphi 0, %s84
      %s106 = sphi 0, %s108
      %s109 = sphi 0, %s106
      %s110 = sphi 0, %s109
      %s126 = sphi 0, %s110
    $region4: #{tpu_custom_call.1} parent=1 // loop_header_branch
      %15 = sbr.rel (%p13) target = $region8
    $region5: #{tpu_custom_call.1} parent=1 // loop_body
      %s17 = ssub.s32 %s12, 1
      %s18 = ssub.s32 %s12, 2
      %s25 = sadd.s32 1, %s20
      %p26 = scmp.ge.s32.totalorder %s25, 1
      %s27 = scalar_select %p26, 0, %s25
      %s28 = sadd.s32 1, %s19
      %s29 = scalar_select %p26, %s28, %s19
      %p30 = scmp.ge.s32.totalorder %s29, 2
      %s31 = scalar_select %p30, 0, %s29
      %s32 = ssub.s32 %s19, %s31
      %s33 = ssub.s32 %s20, %s27
      %s34 = sor.u32 %s32, %s33
      %p35 = scmp.eq.s32.totalorder %s34, 0
      %s37 = sadd.s32 %s36, 1
      %s38 = scalar_select %p35, %s36, %s37
      %p41 = pneg %p35
      %p42 = scmp.eq.s32.totalorder %s12, 1
      %p43 = por %p41, %p42
      %p44 = scmp.ne.s32.totalorder %s36, %s39
      %p45 = scmp.eq.s32.totalorder %s12, 0
      %p46 = por %p44, %p45
      %p47 = scmp.ne.s32.totalorder %s36, %s39
      %p48 = scmp.eq.s32.totalorder %s17, 1
      %p49 = por %p47, %p48
      %p50 = scmp.ne.s32.totalorder %s39, %s40
      %p51 = scmp.eq.s32.totalorder %s17, 0
      %p52 = por %p50, %p51
      %p53 = scmp.ne.s32.totalorder %s39, %s40
      %p54 = scmp.eq.s32.totalorder %s18, 1
      %p55 = por %p53, %p54
      %p57 = scmp.ne.s32.totalorder %s40, %s56
      %p58 = scmp.eq.s32.totalorder %s18, 0
      %p59 = por %p57, %p58
      %s61 = sadd.s32 %s60, 1
      %p64 = scmp.eq.s32.totalorder %s12, 1
      %p65 = scmp.ne.s32.totalorder %s60, %s62
      %p66 = scmp.eq.s32.totalorder %s12, 0
      %p67 = por %p65, %p66
      %p68 = scmp.ne.s32.totalorder %s60, %s62
      %p69 = scmp.eq.s32.totalorder %s17, 1
      %p70 = por %p68, %p69
      %p71 = scmp.ne.s32.totalorder %s62, %s63
      %p72 = scmp.eq.s32.totalorder %s17, 0
      %p73 = por %p71, %p72
      %p74 = scmp.ne.s32.totalorder %s62, %s63
      %p75 = scmp.eq.s32.totalorder %s18, 1
      %p76 = por %p74, %p75
      %p78 = scmp.ne.s32.totalorder %s63, %s77
      %p79 = scmp.eq.s32.totalorder %s18, 0
      %p80 = por %p78, %p79
      %s82 = sadd.s32 %s81, 1
      %p85 = scmp.eq.s32.totalorder %s12, 1
      %p86 = scmp.ne.s32.totalorder %s81, %s83
      %p87 = scmp.eq.s32.totalorder %s12, 0
      %p88 = por %p86, %p87
      %p89 = scmp.ne.s32.totalorder %s81, %s83
      %p90 = scmp.eq.s32.totalorder %s17, 1
      %p91 = por %p89, %p90
      %p92 = scmp.ne.s32.totalorder %s83, %s84
      %p93 = scmp.eq.s32.totalorder %s17, 0
      %p94 = por %p92, %p93
      %p95 = scmp.ne.s32.totalorder %s83, %s84
      %p96 = scmp.eq.s32.totalorder %s18, 1
      %p97 = por %p95, %p96
      %p99 = scmp.ne.s32.totalorder %s84, %s98
      %p100 = scmp.eq.s32.totalorder %s18, 0
      %p101 = por %p99, %p100
      %s102 = ssub.s32 %s19, %s31
      %s103 = ssub.s32 %s20, %s27
      %s104 = sor.u32 %s102, %s103
      %p105 = scmp.eq.s32.totalorder %s104, 0
      %s107 = sadd.s32 %s106, 1
      %s108 = scalar_select %p105, %s106, %s107
      %p111 = pneg %p105
      %p112 = scmp.eq.s32.totalorder %s12, 1
      %p113 = por %p111, %p112
      %p114 = scmp.ne.s32.totalorder %s106, %s109
      %p115 = scmp.eq.s32.totalorder %s12, 0
      %p116 = por %p114, %p115
      %p117 = scmp.ne.s32.totalorder %s106, %s109
      %p118 = scmp.eq.s32.totalorder %s17, 1
      %p119 = por %p117, %p118
      %p120 = scmp.ne.s32.totalorder %s109, %s110
      %p121 = scmp.eq.s32.totalorder %s17, 0
      %p122 = por %p120, %p121
      %p123 = scmp.ne.s32.totalorder %s109, %s110
      %p124 = scmp.eq.s32.totalorder %s18, 1
      %p125 = por %p123, %p124
      %p127 = scmp.ne.s32.totalorder %s110, %s126
      %p128 = scmp.eq.s32.totalorder %s18, 0
      %p129 = por %p127, %p128
      %p130 = scmp.le.s32.totalorder 1, %s12
      %p131 = scmp.lt.s32.totalorder %s12, 3
      %p132 = pnand %p130, %p131
      %p133 = pneg %p132
      // Predicated region
      $region9: #{tpu_custom_call.1} parent=5 // pred_check
        _
      $region10: #{tpu_custom_call.1} parent=5 // pred_check_branch
        %135 = sbr.rel (%p132) target = $region12
      $region11: #{tpu_custom_call.1} parent=5 // pred_region
        %s136 = ssub.s32 %s12, 1
        // Predicated region
        $region13: #{tpu_custom_call.1} parent=11 // pred_check
          %p137 = pneg %p73
        $region14: #{tpu_custom_call.1} parent=11 // pred_check_branch
          %139 = sbr.rel (%p137) target = $region16
        $region15: #{tpu_custom_call.1} parent=11 // pred_region
          _
        $region16: #{tpu_custom_call.1} parent=11 // pred_fallthru
          _
        // Predicated region
        $region17: #{tpu_custom_call.1} parent=11 // pred_check
          %p140 = pneg %p94
        $region18: #{tpu_custom_call.1} parent=11 // pred_check_branch
          %142 = sbr.rel (%p140) target = $region20
        $region19: #{tpu_custom_call.1} parent=11 // pred_region
          _
        $region20: #{tpu_custom_call.1} parent=11 // pred_fallthru
          _
      $region12: #{tpu_custom_call.1} parent=5 // pred_fallthru
        _
      %p143 = scmp.lt.s32.totalorder %s12, 2
      // Predicated region
      $region21: #{tpu_custom_call.1} parent=5 // pred_check
        %p144 = pneg %p143
      $region22: #{tpu_custom_call.1} parent=5 // pred_check_branch
        %146 = sbr.rel (%p144) target = $region24
      $region23: #{tpu_custom_call.1} parent=5 // pred_region
        // Predicated region
        $region25: #{tpu_custom_call.1} parent=23 // pred_check
          %p147 = pneg %p46
        $region26: #{tpu_custom_call.1} parent=23 // pred_check_branch
          %149 = sbr.rel (%p147) target = $region28
        $region27: #{tpu_custom_call.1} parent=23 // pred_region
          %p150 = scmp.lt.s32.totalorder %s19, 1
          %s151 = scalar_select %p150, %s19, 1
          %p152 = scmp.lt.s32.totalorder %s20, 0
          %s153 = scalar_select %p152, %s20, 0
          %s154 = sadd.s32 %s153, %s151
          %s155 = smul.addr %s154, 4
          %s156 = scalar_lea.vmem %s0, %s155
        $region28: #{tpu_custom_call.1} parent=23 // pred_fallthru
          _
      $region24: #{tpu_custom_call.1} parent=5 // pred_fallthru
        _
      %p157 = scmp.le.s32.totalorder 1, %s12
      %p158 = scmp.lt.s32.totalorder %s12, 3
      %p159 = pnand %p157, %p158
      %p160 = pneg %p159
      // Predicated region
      $region29: #{tpu_custom_call.1} parent=5 // pred_check
        _
      $region30: #{tpu_custom_call.1} parent=5 // pred_check_branch
        %162 = sbr.rel (%p159) target = $region32
      $region31: #{tpu_custom_call.1} parent=5 // pred_region
        %s163 = ssub.s32 %s12, 1
        %p164 = scmp.lt.s32.totalorder %s21, 1
        %s165 = scalar_select %p164, %s21, 1
        %p166 = scmp.lt.s32.totalorder %s22, 0
        %s167 = scalar_select %p166, %s22, 0
        %s168 = sadd.s32 %s167, %s165
        %s169 = smul.addr %s168, 4
        %s170 = scalar_lea.vmem %s0, %s169
        %p171 = pneg %p52
        %p172 = pneg %p49
        %p173 = pneg %p73
        %p174 = pneg %p70
        %p175 = pneg %p94
        %p176 = pneg %p91
        %p177 = pneg %p122
        %p178 = pneg %p119
        %s179 = sand.u32 %s109, 1
        %s180 = scalar_lea.sflag [#allocation3], %s179
        %s181 = sand.u32 %s109, 1
        %s182 = smul.addr %s181, 32
        %s183 = scalar_lea.vmem [#allocation2], %s182
        %p184 = scmp.lt.s32.totalorder %s21, 1
        %s185 = scalar_select %p184, %s21, 1
        %p186 = scmp.lt.s32.totalorder %s22, 0
        %s187 = scalar_select %p186, %s22, 0
        %s188 = sadd.s32 %s187, %s185
        %s189 = smul.addr %s188, 4
        %s190 = scalar_lea.vmem %s0, %s189
        %v191 = vld [vmem:[%s1] sm:$0xff]
        %v192 = vld [vmem:[%s1 + $0x8] sm:$0xff]
        %v193 = vld [vmem:[%s1 + $0x10] sm:$0xff]
        %v194 = vld [vmem:[%s1 + $0x18] sm:$0xff]
        %v195 = vld [vmem:[%s2] sm:$0xff]
        %v196 = vld [vmem:[%s2 + $0x8] sm:$0xff]
        %v197 = vld [vmem:[%s2 + $0x10] sm:$0xff]
        %v198 = vld [vmem:[%s2 + $0x18] sm:$0xff]
        %v199 = vld [vmem:[%s190] sm:$0xf]
        %201 = vset.pattern.permute.xlu0 0
        %202 = vperm.xlu0 %201, %v195
        %v203 = vpop.permute.xlu0 %202
        %206 = vset.pattern.permute.xlu0 0
        %207 = vperm.xlu0 %206, %v196
        %v208 = vpop.permute.xlu0 %207
        %211 = vset.pattern.permute.xlu0 0
        %212 = vperm.xlu0 %211, %v197
        %v213 = vpop.permute.xlu0 %212
        %216 = vset.pattern.permute.xlu0 0
        %217 = vperm.xlu0 %216, %v198
        %v218 = vpop.permute.xlu0 %217
        %vm220 = vcmask 31744
        %v222 = vsel %vm220, %v191, 0
        %v225 = vsel %vm220, %v192, 0
        %v228 = vsel %vm220, %v193, 0
        %v231 = vsel %vm220, %v194, 0
        %vm233 = vcmask 1043456
        %v235 = vsel %vm233, %v199, 0
        %237 = vmatpush.msra.mxu0 0.0
        %238 = vmatpush.msra.mxu0 0.0
        %239 = vmatpush.msra.mxu0 0.0
        %240 = vmatpush.msra.mxu0 0.0
        %241 = vmatpush.msra.mxu0 0.0
        %242 = vmatpush.msra.mxu0 0.0
        %243 = vmatpush.msra.mxu0 0.0
        %244 = vmatpush.msra.mxu0 0.0
        %245 = vmatpush.msra.mxu0 0.0
        %246 = vmatpush.msra.mxu0 0.0
        %247 = vmatpush.msra.mxu0 0.0
        %248 = vmatpush.msra.mxu0 0.0
        %249 = vmatpush.msra.mxu0 0.0
        %250 = vmatpush.msra.mxu0 0.0
        %251 = vmatpush.msra.mxu0 0.0
        %252 = vmatpush.msra.mxu0 %v235
        %253 = vmatmul.f32.gmra.mxu0 %v222
        %v254 = vpop.f32.mrf.mxu0
        %v255 = vadd.f32 %v203, %v254
        %256 = vmatmul.f32.gmra.mxu0 %v225
        %v257 = vpop.f32.mrf.mxu0
        %v258 = vadd.f32 %v208, %v257
        %259 = vmatmul.f32.gmra.mxu0 %v228
        %v260 = vpop.f32.mrf.mxu0
        %v261 = vadd.f32 %v213, %v260
        %262 = vmatmul.f32.gmra.mxu0 %v231
        %v263 = vpop.f32.mrf.mxu0
        %v264 = vadd.f32 %v218, %v263
        %265 = vdwg.mxu0
        %266 = vst [vmem:[%s183] sm:$0xff] %v255
        %267 = vst [vmem:[%s183 + $0x8] sm:$0xff] %v258
        %268 = vst [vmem:[%s183 + $0x10] sm:$0xff] %v261
        %269 = vst [vmem:[%s183 + $0x18] sm:$0xff] %v264
        %s270 = sand.u32 %s109, 1
        %s271 = scalar_lea.sflag [#allocation3], %s270
        %s272 = sand.u32 %s109, 1
        %s273 = smul.addr %s272, 32
        %s274 = scalar_lea.vmem [#allocation2], %s273
        // Predicated region
        $region33: #{tpu_custom_call.1} parent=31 // pred_check
          %p275 = pneg %p119
        $region34: #{tpu_custom_call.1} parent=31 // pred_check_branch
          %277 = sbr.rel (%p275) target = $region36
        $region35: #{tpu_custom_call.1} parent=31 // pred_region
          %279 = vsyncadd %s271, 0
          %s280 = smul.addr %s21, 4
          %s281 = sadd.s32 %s22, %s280
          %s282 = smul.addr %s281, 8
          %s283 = scalar_lea.hbm %s3, %s282
          %s284 = sshll.u32 %s274, 4
          %s285 = int_to_ptr.vmem [resolvable:$true] %s284
          %s286 = sshll.u32 %s283, 4
          %s287 = int_to_ptr.hbm [resolvable:$true] %s286
          %292 = dma.vmem_to_hbm [thread:$0]  %s285, 512, %s287, %s271, 128, 128, 8
        $region36: #{tpu_custom_call.1} parent=31 // pred_fallthru
          _
      $region32: #{tpu_custom_call.1} parent=5 // pred_fallthru
        _
      %p293 = scmp.le.s32.totalorder 2, %s12
      // Predicated region
      $region37: #{tpu_custom_call.1} parent=5 // pred_check
        %p294 = pneg %p293
      $region38: #{tpu_custom_call.1} parent=5 // pred_check_branch
        %296 = sbr.rel (%p294) target = $region40
      $region39: #{tpu_custom_call.1} parent=5 // pred_region
        %s297 = ssub.s32 %s12, 2
        // Predicated region
        $region41: #{tpu_custom_call.1} parent=39 // pred_check
          %p298 = pneg %p125
        $region42: #{tpu_custom_call.1} parent=39 // pred_check_branch
          %300 = sbr.rel (%p298) target = $region44
        $region43: #{tpu_custom_call.1} parent=39 // pred_region
          %s301 = sand.u32 %s110, 1
          %s302 = scalar_lea.sflag [#allocation3], %s301
          %s303 = sand.u32 %s110, 1
          %s304 = smul.addr %s303, 32
          %s305 = scalar_lea.vmem [#allocation2], %s304
          %307 = dma.done %s302, 512
        $region44: #{tpu_custom_call.1} parent=39 // pred_fallthru
          _
      $region40: #{tpu_custom_call.1} parent=5 // pred_fallthru
        _
    $region6: #{tpu_custom_call.1} parent=1 // loop_footer
      %s16 = sadd.s32 1, %s12
    $region7: #{tpu_custom_call.1} parent=1 // loop_footer_branch
      %11 = sbr.rel target = $region3
    $region8: #{tpu_custom_call.1} parent=1 // loop_exit
      _
    %308 = vsyncpa [#allocation3], 1
    %s309 = scalar_lea.sflag [#allocation3], 1
    %310 = vsyncpa %s309, 1

</llo_original>
